<compile_context>
chip_gen: v5e
topology: v5e:2x2
jax: 0.10.0
libtpu: 0.0.40
codegen_flags: <defaults>
</compile_context>

<pallas_src>
import jax
import jax.numpy as jnp
from jax import lax
from jax.experimental import pallas as pl
from jax.experimental.pallas import tpu as pltpu

EPS = 1e-4
NEG_SLOPE = 0.01

_LANE = 128
_X_RESIDENT_LIMIT = 4 << 20   # keep the whole (padded, cast) x resident if <= 4 MiB


def _round_up(x, m):
    return ((x + m - 1) // m) * m


def _pick_tile(padded_dim, max_tile):
    """Largest multiple-of-128 tile <= max_tile that divides padded_dim."""
    t = min(max_tile, padded_dim)
    t = max(_LANE, (t // _LANE) * _LANE)
    while padded_dim % t != 0:
        t -= _LANE
    return t


def _vmem_capacity_bytes():
    try:
        return int(pltpu.get_tpu_info().vmem_capacity_bytes)
    except Exception:
        return 64 << 20          # conservative default: v7x per-TensorCore VMEM


def prepare_weight(weight, compute_dtype=None):
    """One-time weight prep — hoist this OUT of the per-call hot path.

    Pads [out, in], transposes to [K_pad, N_pad] (MXU-native RHS layout so the
    kernel needs no per-tile transpose) and casts to the MXU operand dtype.
    bf16 is recommended on all of v5e/v6e/v7x: v5e runs f32 matmuls as
    multi-pass bf16 emulation anyway, so bf16 operands are ~2-4x faster and
    halve weight DMA; the BN/LeakyReLU epilogue stays f32 regardless.
    """
    N, K = weight.shape
    if compute_dtype is None:
        compute_dtype = weight.dtype
    K_pad = _round_up(K, _LANE)
    N_pad = _round_up(N, _LANE)
    w_t = jnp.transpose(weight)                      # [K, N]
    if (K_pad != K) or (N_pad != N):
        w_t = jnp.pad(w_t, ((0, K_pad - K), (0, N_pad - N)))
    # TODO(synk): for the small-batch weight-bandwidth-bound regime, add an
    # int8 (v5e/v6e) / fp8-e4m3 (v7x) quantized weight path with the per-feature
    # dequant scale folded into the BN epilogue.
    return w_t.astype(compute_dtype)


def _make_kernel(tk, x_resident, use_scratch):
    def _epilogue(y, o_ref):
        # BatchNorm1d (training mode, affine=False): per-feature batch stats,
        # biased variance, eps inside rsqrt; the full batch is resident in each
        # (B, tn) block so the statistics are exact. LeakyReLU slope 0.01.
        mean = jnp.mean(y, axis=0, keepdims=True)
        centered = y - mean
        var = jnp.mean(centered * centered, axis=0, keepdims=True)
        y_hat = centered * lax.rsqrt(var + EPS)
        o_ref[...] = jnp.where(y_hat >= 0, y_hat, NEG_SLOPE * y_hat).astype(o_ref.dtype)

    def _x_block(x_ref, k):
        if x_resident:
            # x holds the full padded K; slice the current tk chunk.
            return x_ref[:, pl.ds(pl.multiple_of(k * tk, _LANE), tk)]
        return x_ref[...]

    if use_scratch:
        def kernel(x_ref, w_ref, o_ref, acc_ref):
            k = pl.program_id(1)

            @pl.when(k == 0)
            def _():
                acc_ref[...] = jnp.zeros_like(acc_ref)

            acc_ref[...] += jnp.dot(_x_block(x_ref, k), w_ref[...],
                                    preferred_element_type=jnp.float32)

            @pl.when(k == pl.num_programs(1) - 1)
            def _():
                _epilogue(acc_ref[...], o_ref)
    else:
        # Output dtype is f32: accumulate directly in the resident output
        # block — saves B*tn*4 bytes of VMEM and a full-tile copy.
        def kernel(x_ref, w_ref, o_ref):
            k = pl.program_id(1)

            @pl.when(k == 0)
            def _():
                o_ref[...] = jnp.zeros_like(o_ref)

            o_ref[...] += jnp.dot(_x_block(x_ref, k), w_ref[...],
                                  preferred_element_type=jnp.float32)

            @pl.when(k == pl.num_programs(1) - 1)
            def _():
                _epilogue(o_ref[...], o_ref)

    return kernel


def linear_bn_leaky_relu_prepared(x, w_prepared, out_features):
    """Forward pass given a pre-padded / pre-transposed / pre-cast weight.

    x: [B, in_features]; w_prepared: [K_pad, N_pad] from prepare_weight().
    Output dtype matches x.dtype; BN/LeakyReLU always run in f32.
    """
    B, K = x.shape
    K_pad, N_pad = w_prepared.shape
    assert K_pad == _round_up(K, _LANE), "prepared weight does not match in_features"
    assert N_pad >= out_features
    out_dtype = x.dtype
    compute_dtype = w_prepared.dtype
    in_bpe = jnp.dtype(compute_dtype).itemsize
    out_bpe = jnp.dtype(out_dtype).itemsize

    # Per-call x prep (x changes every call, so it cannot be hoisted): zero-pad
    # K up to a lane multiple (contributes nothing to the dot) and cast to the
    # MXU operand dtype. The batch axis is never padded: BN stats need the
    # true batch.
    x_p = x if K_pad == K else jnp.pad(x, ((0, 0), (0, K_pad - K)))
    x_p = x_p.astype(compute_dtype)

    # --- B-aware tile / VMEM budgeting --------------------------------------
    vmem_cap = _vmem_capacity_bytes()
    max_tile = 1024 if vmem_cap >= (100 << 20) else 512     # v5e/v6e vs v7x
    budget = max(24 << 20, min(vmem_cap // 2, 48 << 20))    # working-set target

    # Keep x resident across the whole grid when small: constant index_map
    # means it is DMA'd exactly once instead of once per (n, k) step.
    x_resident = (B * K_pad * in_bpe) <= min(_X_RESIDENT_LIMIT, budget // 4)
    use_scratch = out_dtype != jnp.float32

    tn_cap = max_tile
    if N_pad >= 2 * _LANE:
        # >=2 tiles on the parallel N axis so v7x's two TensorCores both work.
        tn_cap = min(tn_cap, max(_LANE, (N_pad // 2 // _LANE) * _LANE))
    tn = _pick_tile(N_pad, tn_cap)
    tk = _pick_tile(K_pad, max_tile)

    def _vmem_need(tn_, tk_):
        xk = K_pad if x_resident else tk_
        return (2 * B * xk * in_bpe            # x (double-buffered worst case)
                + 2 * tk_ * tn_ * in_bpe       # weight double buffer
                + 2 * B * tn_ * out_bpe        # output double buffer
                + (B * tn_ * 4 if use_scratch else 0))

    while _vmem_need(tn, tk) > budget and tk > _LANE:
        tk = _pick_tile(K_pad, tk - _LANE)
    while _vmem_need(tn, tk) > budget and tn > _LANE:
        tn = _pick_tile(N_pad, tn - _LANE)

    vmem_limit = int(max(32 << 20, min(vmem_cap - (8 << 20),
                                       _vmem_need(tn, tk) + (8 << 20))))

    if x_resident:
        x_spec = pl.BlockSpec((B, K_pad), lambda n, k: (0, 0))
    else:
        x_spec = pl.BlockSpec((B, tk), lambda n, k: (0, k))

    cost = pl.CostEstimate(
        flops=2 * B * K_pad * N_pad,
        transcendentals=N_pad,                 # one rsqrt per output feature
        bytes_accessed=in_bpe * (B * K_pad + K_pad * N_pad) + out_bpe * B * N_pad,
    )

    # NOTE: if xprof shows exposed weight-DMA waits between k steps at tiny B,
    # sweep pipeline_mode=pl.Buffered(3) on the weight BlockSpec.
    out_p = pl.pallas_call(
        _make_kernel(tk, x_resident, use_scratch),
        out_shape=jax.ShapeDtypeStruct((B, N_pad), out_dtype),
        grid_spec=pltpu.PrefetchScalarGridSpec(
            num_scalar_prefetch=0,
            grid=(N_pad // tn, K_pad // tk),   # reduction (K) axis last
            in_specs=[
                x_spec,
                # Pre-transposed weight [K_pad, N_pad]: MXU-native RHS layout,
                # no per-k-tile transpose in the kernel.
                pl.BlockSpec((tk, tn), lambda n, k: (k, n)),
            ],
            out_specs=pl.BlockSpec((B, tn), lambda n, k: (0, n)),
            scratch_shapes=((pltpu.VMEM((B, tn), jnp.float32),) if use_scratch else ()),
        ),
        compiler_params=pltpu.CompilerParams(
            dimension_semantics=("parallel", "arbitrary"),
            vmem_limit_bytes=vmem_limit,
        ),
        cost_estimate=cost,
    )(x_p, w_prepared)

    # TODO(synk): training-mode BatchNorm1d also updates running_mean/var in
    # PyTorch; only the forward output is reproduced here.
    # TODO(synk): the module's bias=True variant (Linear bias + affine BN
    # gamma/beta) is not implemented; the spec default (bias=False ->
    # affine=False) is what this kernel matches.

    # Padded N columns normalize to exact zeros and are sliced off.
    return out_p[:, :out_features] if N_pad != out_features else out_p


def linear_bn_leaky_relu(x, weight, *, compute_dtype=None):
    """One-shot convenience wrapper (prep + run). For repeated calls, call
    prepare_weight() once and use linear_bn_leaky_relu_prepared() in the hot
    path so the weight pad/transpose/cast is not repeated every step."""
    w_prep = prepare_weight(weight, compute_dtype)
    return linear_bn_leaky_relu_prepared(x, w_prep, weight.shape[0])


def _reference(x, weight):
    # Pure-JAX reference of the PyTorch forward (training-mode BN, affine=False).
    y = x @ weight.T
    mean = jnp.mean(y, axis=0, keepdims=True)
    var = jnp.mean((y - mean) ** 2, axis=0, keepdims=True)
    y_hat = (y - mean) / jnp.sqrt(var + EPS)
    return jnp.where(y_hat >= 0, y_hat, NEG_SLOPE * y_hat)


if __name__ == "__main__":
    # Small shapes consistent with a Linear_BN_leakyReLU block.
    B, in_features, out_features = 8, 32, 32

    key = jax.random.PRNGKey(0)
    kx, kw = jax.random.split(key)

    x = jax.random.normal(kx, (B, in_features), dtype=jnp.float32)
    # Deterministic init mimicking nn.Linear's kaiming-uniform range (+/- 1/sqrt(in)).
    bound = 1.0 / (in_features ** 0.5)
    weight = jax.random.uniform(
        kw, (out_features, in_features), dtype=jnp.float32, minval=-bound, maxval=bound
    )

    ref = _reference(x, weight)

    # Exact-semantics path: weight prepared ONCE (f32 MXU operands), jitted forward.
    w_prep_f32 = prepare_weight(weight)
    fwd_f32 = jax.jit(lambda xx: linear_bn_leaky_relu_prepared(xx, w_prep_f32, out_features))
    out_f32 = jax.block_until_ready(fwd_f32(x))
    assert out_f32.shape == (B, out_features)
    assert jnp.allclose(out_f32, ref, atol=1e-4, rtol=1e-4)

    # Fast path (recommended on v5e/v6e/v7x): bf16 MXU operands, f32 BN/LeakyReLU.
    # Note: bf16 changes the batch statistics themselves (mean/var from bf16
    # products), hence the looser tolerance.
    w_prep_bf16 = prepare_weight(weight, compute_dtype=jnp.bfloat16)
    fwd_bf16 = jax.jit(lambda xx: linear_bn_leaky_relu_prepared(xx, w_prep_bf16, out_features))
    out_bf16 = jax.block_until_ready(fwd_bf16(x))
    assert out_bf16.shape == (B, out_features)
    assert jnp.allclose(out_bf16, ref, atol=5e-2, rtol=5e-2)

    # One-shot convenience wrapper still works.
    out_conv = jax.block_until_ready(linear_bn_leaky_relu(x, weight))
    assert jnp.allclose(out_conv, ref, atol=1e-4, rtol=1e-4)

    print("KERNEL_OK")
</pallas_src>

<mosaic_0001>
module attributes {stable_mosaic.version = 11 : i64} {
  func.func @kernel(%arg0: i32, %arg1: i32, %arg2: memref<8x128xf32, #tpu.memory_space<vmem>>, %arg3: memref<128x128xf32, #tpu.memory_space<vmem>>, %arg4: memref<8x128xf32, #tpu.memory_space<vmem>>) attributes {dimension_semantics = [#tpu.dimension_semantics<parallel>, #tpu.dimension_semantics<arbitrary>], iteration_bounds = array<i64: 1, 1>, scalar_prefetch = 0 : i64, scratch_operands = 0 : i64, tpu.core_type = #tpu.core_type<tc>, window_params = [{pipeline_mode = #tpu.pipeline_mode<synchronous>, transform_indices = @transform_0, window_bounds = array<i64: 8, 128>}, {transform_indices = @transform_1, window_bounds = array<i64: 128, 128>}, {transform_indices = @transform_2, window_bounds = array<i64: 8, 128>}]} {
    %c0_i32 = arith.constant 0 : i32
    %0 = arith.cmpi eq, %arg1, %c0_i32 : i32
    %1 = arith.extui %0 : i1 to i32
    %c0_i32_0 = arith.constant 0 : i32
    %2 = arith.cmpi ne, %1, %c0_i32_0 : i32
    scf.if %2 {
      %cst_9 = arith.constant 0.000000e+00 : f32
      %15 = vector.broadcast %cst_9 : f32 to vector<8x128xf32>
      %c0_10 = arith.constant 0 : index
      %c0_11 = arith.constant 0 : index
      %16 = vector.load %arg4[%c0_10, %c0_11] : memref<8x128xf32, #tpu.memory_space<vmem>>, vector<8x128xf32>
      tpu.vector_store %arg4[%c0_10, %c0_11], %15 {strides = array<i32>} : memref<8x128xf32, #tpu.memory_space<vmem>>, vector<8x128xf32>,
    } else {
    }
    %c0 = arith.constant 0 : index
    %c0_1 = arith.constant 0 : index
    %3 = vector.load %arg4[%c0, %c0_1] : memref<8x128xf32, #tpu.memory_space<vmem>>, vector<8x128xf32>
    %c128_i32 = arith.constant 128 : i32
    %4 = arith.muli %arg1, %c128_i32 : i32
    %5 = tpu.assume_multiple %4, 128 : i32
    %c0_2 = arith.constant 0 : index
    %6 = arith.index_cast %5 : i32 to index
    %7 = vector.load %arg2[%c0_2, %6] : memref<8x128xf32, #tpu.memory_space<vmem>>, vector<8x128xf32>
    %c0_3 = arith.constant 0 : index
    %c0_4 = arith.constant 0 : index
    %8 = vector.load %arg3[%c0_3, %c0_4] : memref<128x128xf32, #tpu.memory_space<vmem>>, vector<128x128xf32>
    %cst = arith.constant dense<0.000000e+00> : vector<8x128xf32>
    %9 = tpu.matmul %7, %8, %cst {dimension_numbers = #tpu.dot_dimension_numbers<[1], [0], [0], [1], [0, 0, 1, 1], [], []>} : vector<8x128xf32>, vector<128x128xf32>, vector<8x128xf32> -> vector<8x128xf32>
    %10 = arith.addf %3, %9 : vector<8x128xf32>
    %c0_5 = arith.constant 0 : index
    %c0_6 = arith.constant 0 : index
    %11 = vector.load %arg4[%c0_5, %c0_6] : memref<8x128xf32, #tpu.memory_space<vmem>>, vector<8x128xf32>
    tpu.vector_store %arg4[%c0_5, %c0_6], %10 {strides = array<i32>} : memref<8x128xf32, #tpu.memory_space<vmem>>, vector<8x128xf32>,
    %c0_i32_7 = arith.constant 0 : i32
    %12 = arith.cmpi eq, %arg1, %c0_i32_7 : i32
    %13 = arith.extui %12 : i1 to i32
    %c0_i32_8 = arith.constant 0 : i32
    %14 = arith.cmpi ne, %13, %c0_i32_8 : i32
    scf.if %14 {
      %c0_9 = arith.constant 0 : index
      %c0_10 = arith.constant 0 : index
      %15 = vector.load %arg4[%c0_9, %c0_10] : memref<8x128xf32, #tpu.memory_space<vmem>>, vector<8x128xf32>
      %cst_11 = arith.constant dense<0.000000e+00> : vector<128xf32>
      %16 = vector.multi_reduction <add>, %15, %cst_11 [0] : vector<8x128xf32> to vector<128xf32>
      %17 = vector.shape_cast %16 : vector<128xf32> to vector<1x128xf32>
      %cst_12 = arith.constant 8.000000e+00 : f32
      %18 = vector.broadcast %cst_12 : f32 to vector<1x128xf32>
      %19 = arith.divf %17, %18 : vector<1x128xf32>
      %20 = vector.broadcast %19 : vector<1x128xf32> to vector<8x128xf32>
      %21 = arith.subf %15, %20 : vector<8x128xf32>
      %22 = arith.mulf %21, %21 : vector<8x128xf32>
      %cst_13 = arith.constant dense<0.000000e+00> : vector<128xf32>
      %23 = vector.multi_reduction <add>, %22, %cst_13 [0] : vector<8x128xf32> to vector<128xf32>
      %24 = vector.shape_cast %23 : vector<128xf32> to vector<1x128xf32>
      %cst_14 = arith.constant 8.000000e+00 : f32
      %25 = vector.broadcast %cst_14 : f32 to vector<1x128xf32>
      %26 = arith.divf %24, %25 : vector<1x128xf32>
      %cst_15 = arith.constant 9.99999974E-5 : f32
      %27 = vector.broadcast %cst_15 : f32 to vector<1x128xf32>
      %28 = arith.addf %26, %27 : vector<1x128xf32>
      %29 = math.rsqrt %28 : vector<1x128xf32>
      %30 = vector.broadcast %29 : vector<1x128xf32> to vector<8x128xf32>
      %31 = arith.mulf %21, %30 : vector<8x128xf32>
      %cst_16 = arith.constant 0.000000e+00 : f32
      %32 = vector.broadcast %cst_16 : f32 to vector<8x128xf32>
      %33 = arith.cmpf oge, %31, %32 : vector<8x128xf32>
      %cst_17 = arith.constant 0.00999999977 : f32
      %34 = vector.broadcast %cst_17 : f32 to vector<8x128xf32>
      %35 = arith.mulf %34, %31 : vector<8x128xf32>
      %36 = arith.select %33, %31, %35 : vector<8x128xi1>, vector<8x128xf32>
      %c0_18 = arith.constant 0 : index
      %c0_19 = arith.constant 0 : index
      %37 = vector.load %arg4[%c0_18, %c0_19] : memref<8x128xf32, #tpu.memory_space<vmem>>, vector<8x128xf32>
      tpu.vector_store %arg4[%c0_18, %c0_19], %36 {strides = array<i32>} : memref<8x128xf32, #tpu.memory_space<vmem>>, vector<8x128xf32>,
    } else {
    }
    return
  }
  func.func @transform_0(%arg0: i32, %arg1: i32) -> (i32, i32) {
    %c0_i32 = arith.constant 0 : i32
    %c0_i32_0 = arith.constant 0 : i32
    %c0_i32_1 = arith.constant 0 : i32
    return %c0_i32, %c0_i32_0 : i32, i32
  }
  func.func @transform_1(%arg0: i32, %arg1: i32) -> (i32, i32) {
    %c0_i32 = arith.constant 0 : i32
    return %arg1, %arg0 : i32, i32
  }
  func.func @transform_2(%arg0: i32, %arg1: i32) -> (i32, i32) {
    %c0_i32 = arith.constant 0 : i32
    %c0_i32_0 = arith.constant 0 : i32
    return %c0_i32, %arg0 : i32, i32
  }
}

</mosaic_0001>

<llo_original>
// kernel: _lambda_.1
$region0: #{_lambda_.1}
  #allocation0 [shape = 'u32[]', space=smem, size = 0x4, offset = 0x4, fixed_abs, tag = 'smem constant byte address 0x4 - core index']
  #allocation1 [shape = 'u32[72,128]{1,0:T(1,128)}', space=vmem, size = 0x9000, scoped, tag = 'internal scratch']
  %s0 = inlined_call_operand.vmem [shape: f32[8,128], index: 0, kind: input, shape index: {}]
  %s1 = inlined_call_operand.hbm [shape: f32[128,128], index: 1, kind: input, shape index: {}]
  %s2 = inlined_call_operand.hbm [shape: f32[8,128], index: 2, kind: output, shape index: {}]
  %s3 = sld [smem:[#allocation0]]
  $region30: #{_lambda_.1} parent=0
    _
  %s5 = ssub.s32 1, %s3
  %s6 = scalar_select 0, %s5, %s3
  $region1: #{_lambda_.1} parent=0
    #allocation2 [shape = 'u8[65536]{0}', space=vmem, size = 0x10000, scoped, tag = 'input window, operand 1, single buffered']
    #allocation3 [shape = 's32[1]{0}', space=sflag, size = 0x4, scoped, tag = 'scoped memory for _lambda_.1']
    #allocation4 [shape = 's32[1]{0}', space=sflag, size = 0x4, scoped, tag = 'scoped memory for _lambda_.1']
    #allocation5 [shape = 'u8[4096]{0}', space=vmem, size = 0x1000, scoped, tag = 'output window, operand 0, single buffered']
    %7 = vsyncpa [#allocation3], 0
    %8 = vsyncpa [#allocation4], 0
    // Predicated region
    $region2: #{_lambda_.1} parent=1 // pred_check
      _
    $region3: #{_lambda_.1} parent=1 // pred_check_branch
      %10 = sbr.rel (0) target = $region5
    $region4: #{_lambda_.1} parent=1 // pred_region
      _
    $region5: #{_lambda_.1} parent=1 // pred_fallthru
      _
    // Predicated region
    $region6: #{_lambda_.1} parent=1 // pred_check
      _
    $region7: #{_lambda_.1} parent=1 // pred_check_branch
      %12 = sbr.rel (0) target = $region9
    $region8: #{_lambda_.1} parent=1 // pred_region
      %14 = vsyncadd [#allocation3], 0
      %s15 = sshll.u32 %s1, 4
      %s16 = int_to_ptr.hbm [resolvable:$true] %s15
      %s17 = sshll.u32 [#allocation2], 4
      %s18 = int_to_ptr.vmem [resolvable:$true] %s17
      %23 = dma.hbm_to_vmem [thread:$0]  %s16, 2048, %s18, [#allocation3], 128, 128, 8
    $region9: #{_lambda_.1} parent=1 // pred_fallthru
      _
    // Predicated region
    $region10: #{_lambda_.1} parent=1 // pred_check
      _
    $region11: #{_lambda_.1} parent=1 // pred_check_branch
      %25 = sbr.rel (0) target = $region13
    $region12: #{_lambda_.1} parent=1 // pred_region
      %27 = dma.done [#allocation3], 2048
    $region13: #{_lambda_.1} parent=1 // pred_fallthru
      _
    %p28 = scmp.eq.s32.totalorder 0, 0
    // Predicated region
    $region14: #{_lambda_.1} parent=1 // pred_check
      %p29 = pneg %p28
    $region15: #{_lambda_.1} parent=1 // pred_check_branch
      %31 = sbr.rel (%p29) target = $region17
    $region16: #{_lambda_.1} parent=1 // pred_region
      %32 = vst [vmem:[#allocation5] sm:$0xff] 0.0
    $region17: #{_lambda_.1} parent=1 // pred_fallthru
      _
    %v33 = vld [vmem:[#allocation5] sm:$0xff]
    %s34 = smul.u32 0, 128
    %s35 = sshra.s32 %s34, 7
    %s36 = sand.u32 %s34, 127
    %s37 = scalar_lea.vmem %s0, %s35
    %v38 = vld [vmem:[%s37] sm:$0xff]
    %v39 = vld [vmem:[#allocation2] sm:$0xff]
    %v40 = vld [vmem:[#allocation2 + $0x8] sm:$0xff]
    %v41 = vld [vmem:[#allocation2 + $0x10] sm:$0xff]
    %v42 = vld [vmem:[#allocation2 + $0x18] sm:$0xff]
    %v43 = vld [vmem:[#allocation2 + $0x20] sm:$0xff]
    %v44 = vld [vmem:[#allocation2 + $0x28] sm:$0xff]
    %v45 = vld [vmem:[#allocation2 + $0x30] sm:$0xff]
    %v46 = vld [vmem:[#allocation2 + $0x38] sm:$0xff]
    %v47 = vld [vmem:[#allocation2 + $0x40] sm:$0xff]
    %v48 = vld [vmem:[#allocation2 + $0x48] sm:$0xff]
    %v49 = vld [vmem:[#allocation2 + $0x50] sm:$0xff]
    %v50 = vld [vmem:[#allocation2 + $0x58] sm:$0xff]
    %v51 = vld [vmem:[#allocation2 + $0x60] sm:$0xff]
    %v52 = vld [vmem:[#allocation2 + $0x68] sm:$0xff]
    %v53 = vld [vmem:[#allocation2 + $0x70] sm:$0xff]
    %v54 = vld [vmem:[#allocation2 + $0x78] sm:$0xff]
    %55 = vmatpush.msra.mxu0 %v54
    %56 = vmatpush.msra.mxu0 %v53
    %57 = vmatpush.msra.mxu0 %v52
    %58 = vmatpush.msra.mxu0 %v51
    %59 = vmatpush.msra.mxu0 %v50
    %60 = vmatpush.msra.mxu0 %v49
    %61 = vmatpush.msra.mxu0 %v48
    %62 = vmatpush.msra.mxu0 %v47
    %63 = vmatpush.msra.mxu0 %v46
    %64 = vmatpush.msra.mxu0 %v45
    %65 = vmatpush.msra.mxu0 %v44
    %66 = vmatpush.msra.mxu0 %v43
    %67 = vmatpush.msra.mxu0 %v42
    %68 = vmatpush.msra.mxu0 %v41
    %69 = vmatpush.msra.mxu0 %v40
    %70 = vmatpush.msra.mxu0 %v39
    %71 = vmatmul.f32.gmra.mxu0 %v38
    %v72 = vpop.f32.mrf.mxu0
    %v73 = vadd.f32 0.0, %v72
    %74 = vdwg.mxu0
    %v75 = vadd.f32 %v33, %v73
    %76 = vst [vmem:[#allocation5] sm:$0xff] %v75
    // Predicated region
    $region18: #{_lambda_.1} parent=1 // pred_check
      %p77 = pneg %p28
    $region19: #{_lambda_.1} parent=1 // pred_check_branch
      %79 = sbr.rel (%p77) target = $region21
    $region20: #{_lambda_.1} parent=1 // pred_region
      %v80 = vld [vmem:[#allocation5] sm:$0xff]
      %v81 = vrot.slane %v80, 4
      %v82 = vadd.f32 %v80, %v81
      %v83 = vrot.slane %v82, 2
      %v84 = vadd.f32 %v82, %v83
      %v85 = vrot.slane %v84, 1
      %v86 = vadd.f32 %v84, %v85
      %v87 = vrcp.pop 8.0
      %v88 = vmul.f32 8.0, %v87
      %v89 = vsub.f32 1.0, %v88
      %v90 = vmul.f32 %v87, %v89
      %v91 = vadd.f32 %v87, %v90
      %vm92 = vweird.f32 %v87
      %v93 = vsel %vm92, %v87, %v91
      %v94 = vmul.f32 %v86, %v93
      %v95 = vsub.f32 %v80, %v94
      %v96 = vmul.f32 %v95, %v95
      %v97 = vrot.slane %v96, 4
      %v98 = vadd.f32 %v96, %v97
      %v99 = vrot.slane %v98, 2
      %v100 = vadd.f32 %v98, %v99
      %v101 = vrot.slane %v100, 1
      %v102 = vadd.f32 %v100, %v101
      %v103 = vmul.f32 %v102, %v93
      %v104 = vadd.f32 %v103, 0.0001
      %v105 = vrsqrt.pop %v104
      %v106 = vmul.f32 %v105, %v104
      %v107 = vmul.f32 %v106, %v105
      %v108 = vmul.f32 0.5, %v107
      %v109 = vsub.f32 1.5, %v108
      %v110 = vmul.f32 %v105, %v109
      %vm111 = vweird.f32 %v104
      %vm112 = vweird.f32 %v105
      %vm113 = vmor %vm111, %vm112
      %v114 = vsel %vm113, %v105, %v110
      %v115 = vmul.f32 %v95, %v114
      %vm116 = vcmp.ge.f32.partialorder %v115, 0.0
      %v117 = vmul.f32 %v115, 0.01
      %v118 = vsel %vm116, %v115, %v117
      %119 = vst [vmem:[#allocation5] sm:$0xff] %v118
    $region21: #{_lambda_.1} parent=1 // pred_fallthru
      _
    // Predicated region
    $region22: #{_lambda_.1} parent=1 // pred_check
      _
    $region23: #{_lambda_.1} parent=1 // pred_check_branch
      %121 = sbr.rel (0) target = $region25
    $region24: #{_lambda_.1} parent=1 // pred_region
      %123 = vsyncadd [#allocation4], 0
      %s125 = sshll.u32 [#allocation5], 4
      %s126 = int_to_ptr.vmem [resolvable:$true] %s125
      %s127 = sshll.u32 %s2, 4
      %s128 = int_to_ptr.hbm [resolvable:$true] %s127
      %130 = dma.vmem_to_hbm [thread:$0]  %s126, 128, %s128, [#allocation4]
    $region25: #{_lambda_.1} parent=1 // pred_fallthru
      _
    // Predicated region
    $region26: #{_lambda_.1} parent=1 // pred_check
      _
    $region27: #{_lambda_.1} parent=1 // pred_check_branch
      %132 = sbr.rel (0) target = $region29
    $region28: #{_lambda_.1} parent=1 // pred_region
      %134 = dma.done [#allocation4], 128
    $region29: #{_lambda_.1} parent=1 // pred_fallthru
      _
    %135 = vsyncpa [#allocation3], 1
    %136 = vsyncpa [#allocation4], 1

</llo_original>
